<compile_context>
chip_gen: v7x
topology: tpu7x:2x2x1
jax: 0.10.0
libtpu: 0.0.40
codegen_flags: <defaults>
</compile_context>

<pallas_src>
import jax
import jax.numpy as jnp
from jax.experimental import pallas as pl
from jax.experimental.pallas import tpu as pltpu


def _embed_kernel(cls_row_ref, pos_rest_ref, x_ref, o_ref):
    # cls_row_ref : (1, 1, D)     -- precomputed cls_token + pos_embed[:, :1]
    # pos_rest_ref: (1, N, D)     -- pos_embed[:, 1:]
    # x_ref       : (Bt, N, D)    -- per-grid-step batch tile
    # o_ref       : (Bt, N+1, D)
    bt = x_ref.shape[0]
    n = x_ref.shape[1]
    d = x_ref.shape[2]

    # Row 0 of every batch element: the folded cls+pos row (small masked store).
    o_ref[:, 0:1, :] = jnp.broadcast_to(cls_row_ref[...], (bt, 1, d))

    # Rows 1..N: aligned x slab + pos_rest, stored in one shot.
    o_ref[:, pl.ds(1, n), :] = x_ref[...] + pos_rest_ref[...]


def _choose_batch_tile(B, N, D, itemsize, budget_bytes=24 << 20, max_bt=16):
    """Largest divisor of B whose double-buffered (x + out) block fits the budget."""
    per_elem = (N + (N + 1)) * D * itemsize * 2  # x block + out block, double-buffered
    bt_cap = max(1, budget_bytes // per_elem)
    bt_cap = int(min(bt_cap, max_bt, B))
    if B >= 2:
        # Keep at least 2 grid steps so v7x's two TensorCores both get work.
        bt_cap = max(1, min(bt_cap, B // 2))
    for bt in range(bt_cap, 0, -1):
        if B % bt == 0:
            return bt
    return 1


def embed_timm(x, cls_token, pos_embed, *, batch_tile=None,
               vmem_limit_bytes=64 << 20):
    """x: (B, N, D); cls_token: (1, 1, D); pos_embed: (1, N+1, D) -> (B, N+1, D)."""
    B, N, D = x.shape
    assert cls_token.shape == (1, 1, D), cls_token.shape
    assert pos_embed.shape == (1, N + 1, D), pos_embed.shape

    dtype = x.dtype
    # Fold cls + pos[:, :1] once in the wrapper (tiny), pin params to x.dtype.
    cls_row = (cls_token + pos_embed[:, :1, :]).astype(dtype)    # (1, 1, D)
    pos_rest = pos_embed[:, 1:, :].astype(dtype)                 # (1, N, D)

    if batch_tile is None:
        batch_tile = _choose_batch_tile(B, N, D, jnp.dtype(dtype).itemsize)
    bt = int(batch_tile)
    assert B % bt == 0, (B, bt)

    grid_spec = pltpu.PrefetchScalarGridSpec(
        num_scalar_prefetch=0,
        grid=(B // bt,),
        in_specs=[
            pl.BlockSpec((1, 1, D), lambda b: (0, 0, 0)),        # cls+pos row (shared)
            pl.BlockSpec((1, N, D), lambda b: (0, 0, 0)),        # pos_rest (shared)
            pl.BlockSpec((bt, N, D), lambda b: (b, 0, 0)),       # x batch tile
        ],
        out_specs=pl.BlockSpec((bt, N + 1, D), lambda b: (b, 0, 0)),
    )

    return pl.pallas_call(
        _embed_kernel,
        out_shape=jax.ShapeDtypeStruct((B, N + 1, D), dtype),
        grid_spec=grid_spec,
        compiler_params=pltpu.CompilerParams(
            dimension_semantics=("parallel",),
            vmem_limit_bytes=vmem_limit_bytes,
        ),
    )(cls_row, pos_rest, x)


def embed_timm_ref(x, cls_token, pos_embed):
    """Pure-JAX reference matching the PyTorch forward exactly."""
    B = x.shape[0]
    cls = jnp.broadcast_to(cls_token, (B, 1, x.shape[2]))
    cat = jnp.concatenate([cls, x], axis=1)
    return cat + pos_embed


if __name__ == "__main__":
    # Small shapes: batch=2, seq=8 tokens, hidden=32.
    B, N, D = 2, 8, 32
    key = jax.random.PRNGKey(0)
    kx, kc, kp = jax.random.split(key, 3)

    x = jax.random.normal(kx, (B, N, D), dtype=jnp.float32)
    # Deterministic "parameters" (the module receives them in __init__).
    cls_token = jax.random.normal(kc, (1, 1, D), dtype=jnp.float32) * 0.02
    pos_embed = jax.random.normal(kp, (1, N + 1, D), dtype=jnp.float32) * 0.02

    out = jax.block_until_ready(embed_timm(x, cls_token, pos_embed))

    ref = embed_timm_ref(x, cls_token, pos_embed)
    assert out.shape == (B, N + 1, D), out.shape
    assert jnp.allclose(out, ref, atol=1e-6, rtol=1e-6), "mismatch vs reference"

    print("KERNEL_OK")
</pallas_src>

<mosaic_0001>
module attributes {stable_mosaic.version = 11 : i64} {
  func.func @_embed_kernel(%arg0: i32, %arg1: memref<1x1x32xf32, #tpu.memory_space<vmem>>, %arg2: memref<1x8x32xf32, #tpu.memory_space<vmem>>, %arg3: memref<1x8x32xf32, #tpu.memory_space<vmem>>, %arg4: memref<1x9x32xf32, #tpu.memory_space<vmem>>) attributes {dimension_semantics = [#tpu.dimension_semantics<parallel>], iteration_bounds = array<i64: 2>, scalar_prefetch = 0 : i64, scratch_operands = 0 : i64, tpu.core_type = #tpu.core_type<tc>, window_params = [{pipeline_mode = #tpu.pipeline_mode<synchronous>, transform_indices = @transform_0, window_bounds = array<i64: 1, 1, 32>}, {pipeline_mode = #tpu.pipeline_mode<synchronous>, transform_indices = @transform_1, window_bounds = array<i64: 1, 8, 32>}, {transform_indices = @transform_2, window_bounds = array<i64: 1, 8, 32>}, {transform_indices = @transform_3, window_bounds = array<i64: 1, 9, 32>}]} {
    %c0 = arith.constant 0 : index
    %c0_0 = arith.constant 0 : index
    %c0_1 = arith.constant 0 : index
    %0 = vector.load %arg1[%c0, %c0_0, %c0_1] : memref<1x1x32xf32, #tpu.memory_space<vmem>>, vector<1x1x32xf32>
    %c0_2 = arith.constant 0 : index
    %c0_3 = arith.constant 0 : index
    %c0_4 = arith.constant 0 : index
    %1 = vector.load %arg4[%c0_2, %c0_3, %c0_4] : memref<1x9x32xf32, #tpu.memory_space<vmem>>, vector<1x1x32xf32>
    tpu.vector_store %arg4[%c0_2, %c0_3, %c0_4], %0 {strides = array<i32>} : memref<1x9x32xf32, #tpu.memory_space<vmem>>, vector<1x1x32xf32>,
    %c0_5 = arith.constant 0 : index
    %c0_6 = arith.constant 0 : index
    %c0_7 = arith.constant 0 : index
    %2 = vector.load %arg3[%c0_5, %c0_6, %c0_7] : memref<1x8x32xf32, #tpu.memory_space<vmem>>, vector<1x8x32xf32>
    %c0_8 = arith.constant 0 : index
    %c0_9 = arith.constant 0 : index
    %c0_10 = arith.constant 0 : index
    %3 = vector.load %arg2[%c0_8, %c0_9, %c0_10] : memref<1x8x32xf32, #tpu.memory_space<vmem>>, vector<1x8x32xf32>
    %4 = arith.addf %2, %3 : vector<1x8x32xf32>
    %c0_11 = arith.constant 0 : index
    %c1 = arith.constant 1 : index
    %c0_12 = arith.constant 0 : index
    %5 = vector.load %arg4[%c0_11, %c1, %c0_12] : memref<1x9x32xf32, #tpu.memory_space<vmem>>, vector<1x8x32xf32>
    tpu.vector_store %arg4[%c0_11, %c1, %c0_12], %4 {strides = array<i32>} : memref<1x9x32xf32, #tpu.memory_space<vmem>>, vector<1x8x32xf32>,
    return
  }
  func.func @transform_0(%arg0: i32) -> (i32, i32, i32) {
    %c0_i32 = arith.constant 0 : i32
    %c0_i32_0 = arith.constant 0 : i32
    %c0_i32_1 = arith.constant 0 : i32
    %c0_i32_2 = arith.constant 0 : i32
    return %c0_i32, %c0_i32_0, %c0_i32_1 : i32, i32, i32
  }
  func.func @transform_1(%arg0: i32) -> (i32, i32, i32) {
    %c0_i32 = arith.constant 0 : i32
    %c0_i32_0 = arith.constant 0 : i32
    %c0_i32_1 = arith.constant 0 : i32
    %c0_i32_2 = arith.constant 0 : i32
    return %c0_i32, %c0_i32_0, %c0_i32_1 : i32, i32, i32
  }
  func.func @transform_2(%arg0: i32) -> (i32, i32, i32) {
    %c0_i32 = arith.constant 0 : i32
    %c0_i32_0 = arith.constant 0 : i32
    %c0_i32_1 = arith.constant 0 : i32
    return %arg0, %c0_i32, %c0_i32_0 : i32, i32, i32
  }
  func.func @transform_3(%arg0: i32) -> (i32, i32, i32) {
    %c0_i32 = arith.constant 0 : i32
    %c0_i32_0 = arith.constant 0 : i32
    %c0_i32_1 = arith.constant 0 : i32
    return %arg0, %c0_i32, %c0_i32_0 : i32, i32, i32
  }
}

</mosaic_0001>

<llo_original>
// kernel: tpu_custom_call.1
$region0: #{tpu_custom_call.1}
  #allocation0 [shape = 'u32[]', space=smem, size = 0x4, offset = 0x4, fixed_abs, tag = 'smem constant byte address 0x4 - core index']
  #allocation1 [shape = 'u32[144,128]{1,0:T(1,128)}', space=vmem, size = 0x12000, scoped, tag = 'internal scratch']
  %s0 = inlined_call_operand.hbm [shape: f32[1,1,32], index: 0, kind: input, shape index: {}]
  %s1 = inlined_call_operand.hbm [shape: f32[1,8,32], index: 1, kind: input, shape index: {}]
  %s2 = inlined_call_operand.hbm [shape: f32[2,8,32], index: 2, kind: input, shape index: {}]
  %s3 = inlined_call_operand.hbm [shape: f32[2,9,32], index: 3, kind: output, shape index: {}]
  %s4 = sld [smem:[#allocation0]]
  $region57: #{tpu_custom_call.1} parent=0
    _
  %s6 = ssub.s32 1, %s4
  %s7 = scalar_select 0, %s6, %s4
  $region1: #{tpu_custom_call.1} parent=0
    #allocation2 [shape = 'u8[512]{0}', space=vmem, size = 0x400, scoped, tag = 'input window, operand 0, single buffered']
    #allocation3 [shape = 's32[2]{0}', space=sflag, size = 0x8, scoped, tag = 'scoped memory for tpu_custom_call.1']
    #allocation4 [shape = 's32[2]{0}', space=sflag, size = 0x8, scoped, tag = 'scoped memory for tpu_custom_call.1']
    #allocation5 [shape = 'u8[4096]{0}', space=vmem, size = 0x1000, scoped, tag = 'input window, operand 1, single buffered']
    #allocation6 [shape = 's32[1]{0}', space=sflag, size = 0x4, scoped, tag = 'scoped memory for tpu_custom_call.1']
    #allocation7 [shape = 'u8[8192]{0}', space=vmem, size = 0x2000, scoped, tag = 'input window, operand 2']
    #allocation8 [shape = 'u8[16384]{0}', space=vmem, size = 0x4000, scoped, tag = 'output window, operand 0']
    %8 = vsyncpa [#allocation3], 0
    %9 = vsyncpa [#allocation6], 0
    %10 = vsyncpa [#allocation4], 0
    %s11 = scalar_lea.sflag [#allocation4], 1
    %12 = vsyncpa %s11, 0
    loop: start=0, step=1, limit=4
    $region2: #{tpu_custom_call.1} parent=1 // loop_pre_header
      _
    $region3: #{tpu_custom_call.1} parent=1 // loop_header
      %s14 = sphi 0, %s18
      %p15 = scmp.ge.s32.totalorder %s14, 4
      %s22 = sphi 0, %s22
      %s24 = sphi 0, %s22
      %s25 = sphi 0, %s24
      %s39 = sphi 0, %s25
      %s43 = sphi 0, %s43
      %s45 = sphi 0, %s43
      %s46 = sphi 0, %s45
      %s60 = sphi 0, %s46
      %s66 = sphi 0, %s68
      %s69 = sphi 0, %s66
      %s70 = sphi 0, %s69
      %s86 = sphi 0, %s70
      %s92 = sphi 0, %s94
      %s95 = sphi 0, %s92
      %s96 = sphi 0, %s95
      %s112 = sphi 0, %s96
    $region4: #{tpu_custom_call.1} parent=1 // loop_header_branch
      %17 = sbr.rel (%p15) target = $region8
    $region5: #{tpu_custom_call.1} parent=1 // loop_body
      %s19 = ssub.s32 %s14, 1
      %s20 = ssub.s32 %s14, 2
      %s21 = sadd.s32 %s14, 1
      %s23 = sadd.s32 %s22, 1
      %p26 = scmp.eq.s32.totalorder %s14, 1
      %p27 = scmp.ne.s32.totalorder %s22, %s24
      %p28 = scmp.eq.s32.totalorder %s14, 0
      %p29 = por %p27, %p28
      %p30 = scmp.ne.s32.totalorder %s22, %s24
      %p31 = scmp.eq.s32.totalorder %s19, 1
      %p32 = por %p30, %p31
      %p33 = scmp.ne.s32.totalorder %s24, %s25
      %p34 = scmp.eq.s32.totalorder %s19, 0
      %p35 = por %p33, %p34
      %p36 = scmp.ne.s32.totalorder %s24, %s25
      %p37 = scmp.eq.s32.totalorder %s20, 1
      %p38 = por %p36, %p37
      %p40 = scmp.ne.s32.totalorder %s25, %s39
      %p41 = scmp.eq.s32.totalorder %s20, 0
      %p42 = por %p40, %p41
      %s44 = sadd.s32 %s43, 1
      %p47 = scmp.eq.s32.totalorder %s14, 1
      %p48 = scmp.ne.s32.totalorder %s43, %s45
      %p49 = scmp.eq.s32.totalorder %s14, 0
      %p50 = por %p48, %p49
      %p51 = scmp.ne.s32.totalorder %s43, %s45
      %p52 = scmp.eq.s32.totalorder %s19, 1
      %p53 = por %p51, %p52
      %p54 = scmp.ne.s32.totalorder %s45, %s46
      %p55 = scmp.eq.s32.totalorder %s19, 0
      %p56 = por %p54, %p55
      %p57 = scmp.ne.s32.totalorder %s45, %s46
      %p58 = scmp.eq.s32.totalorder %s20, 1
      %p59 = por %p57, %p58
      %p61 = scmp.ne.s32.totalorder %s46, %s60
      %p62 = scmp.eq.s32.totalorder %s20, 0
      %p63 = por %p61, %p62
      %s64 = ssub.s32 %s14, %s21
      %p65 = scmp.eq.s32.totalorder %s64, 0
      %s67 = sadd.s32 %s66, 1
      %s68 = scalar_select %p65, %s66, %s67
      %p71 = pneg %p65
      %p72 = scmp.eq.s32.totalorder %s14, 1
      %p73 = por %p71, %p72
      %p74 = scmp.ne.s32.totalorder %s66, %s69
      %p75 = scmp.eq.s32.totalorder %s14, 0
      %p76 = por %p74, %p75
      %p77 = scmp.ne.s32.totalorder %s66, %s69
      %p78 = scmp.eq.s32.totalorder %s19, 1
      %p79 = por %p77, %p78
      %p80 = scmp.ne.s32.totalorder %s69, %s70
      %p81 = scmp.eq.s32.totalorder %s19, 0
      %p82 = por %p80, %p81
      %p83 = scmp.ne.s32.totalorder %s69, %s70
      %p84 = scmp.eq.s32.totalorder %s20, 1
      %p85 = por %p83, %p84
      %p87 = scmp.ne.s32.totalorder %s70, %s86
      %p88 = scmp.eq.s32.totalorder %s20, 0
      %p89 = por %p87, %p88
      %s90 = ssub.s32 %s14, %s21
      %p91 = scmp.eq.s32.totalorder %s90, 0
      %s93 = sadd.s32 %s92, 1
      %s94 = scalar_select %p91, %s92, %s93
      %p97 = pneg %p91
      %p98 = scmp.eq.s32.totalorder %s14, 1
      %p99 = por %p97, %p98
      %p100 = scmp.ne.s32.totalorder %s92, %s95
      %p101 = scmp.eq.s32.totalorder %s14, 0
      %p102 = por %p100, %p101
      %p103 = scmp.ne.s32.totalorder %s92, %s95
      %p104 = scmp.eq.s32.totalorder %s19, 1
      %p105 = por %p103, %p104
      %p106 = scmp.ne.s32.totalorder %s95, %s96
      %p107 = scmp.eq.s32.totalorder %s19, 0
      %p108 = por %p106, %p107
      %p109 = scmp.ne.s32.totalorder %s95, %s96
      %p110 = scmp.eq.s32.totalorder %s20, 1
      %p111 = por %p109, %p110
      %p113 = scmp.ne.s32.totalorder %s96, %s112
      %p114 = scmp.eq.s32.totalorder %s20, 0
      %p115 = por %p113, %p114
      %p116 = scmp.le.s32.totalorder 1, %s14
      %p117 = scmp.lt.s32.totalorder %s14, 3
      %p118 = pnand %p116, %p117
      %p119 = pneg %p118
      // Predicated region
      $region9: #{tpu_custom_call.1} parent=5 // pred_check
        _
      $region10: #{tpu_custom_call.1} parent=5 // pred_check_branch
        %121 = sbr.rel (%p118) target = $region12
      $region11: #{tpu_custom_call.1} parent=5 // pred_region
        %s122 = ssub.s32 %s14, 1
        // Predicated region
        $region13: #{tpu_custom_call.1} parent=11 // pred_check
          %p123 = pneg %p35
        $region14: #{tpu_custom_call.1} parent=11 // pred_check_branch
          %125 = sbr.rel (%p123) target = $region16
        $region15: #{tpu_custom_call.1} parent=11 // pred_region
          %s127 = ssub.s32 16, 16
          %128 = vsyncadd [#allocation3], %s127
          %s130 = sshll.u32 [#allocation2], 4
          %s131 = int_to_ptr.vmem [resolvable:$true] %s130
          %133 = dma.hbm_to_vmem [thread:$0]  %s0, 16, %s131, [#allocation3]
        $region16: #{tpu_custom_call.1} parent=11 // pred_fallthru
          _
        // Predicated region
        $region17: #{tpu_custom_call.1} parent=11 // pred_check
          %p134 = pneg %p56
        $region18: #{tpu_custom_call.1} parent=11 // pred_check_branch
          %136 = sbr.rel (%p134) target = $region20
        $region19: #{tpu_custom_call.1} parent=11 // pred_region
          %s138 = ssub.s32 128, 128
          %139 = vsyncadd [#allocation6], %s138
          %s141 = sshll.u32 [#allocation5], 4
          %s142 = int_to_ptr.vmem [resolvable:$true] %s141
          %144 = dma.hbm_to_vmem [thread:$0]  %s1, 128, %s142, [#allocation6]
        $region20: #{tpu_custom_call.1} parent=11 // pred_fallthru
          _
      $region12: #{tpu_custom_call.1} parent=5 // pred_fallthru
        _
      %p145 = scmp.lt.s32.totalorder %s14, 2
      // Predicated region
      $region21: #{tpu_custom_call.1} parent=5 // pred_check
        %p146 = pneg %p145
      $region22: #{tpu_custom_call.1} parent=5 // pred_check_branch
        %148 = sbr.rel (%p146) target = $region24
      $region23: #{tpu_custom_call.1} parent=5 // pred_region
        // Predicated region
        $region25: #{tpu_custom_call.1} parent=23 // pred_check
          %p149 = pneg %p76
        $region26: #{tpu_custom_call.1} parent=23 // pred_check_branch
          %151 = sbr.rel (%p149) target = $region28
        $region27: #{tpu_custom_call.1} parent=23 // pred_region
          %s152 = sand.u32 %s14, 1
          %s153 = scalar_lea.sflag [#allocation3], %s152
          %s154 = sand.u32 %s66, 1
          %s155 = smul.addr %s154, 8
          %s156 = scalar_lea.vmem [#allocation7], %s155
          %s158 = ssub.s32 128, 128
          %159 = vsyncadd %s153, %s158
          %s160 = smul.addr %s14, 128
          %s161 = scalar_lea.hbm %s2, %s160
          %s163 = sshll.u32 %s156, 4
          %s164 = int_to_ptr.vmem [resolvable:$true] %s163
          %166 = dma.hbm_to_vmem [thread:$0]  %s161, 128, %s164, %s153
        $region28: #{tpu_custom_call.1} parent=23 // pred_fallthru
          _
      $region24: #{tpu_custom_call.1} parent=5 // pred_fallthru
        _
      %p167 = scmp.le.s32.totalorder 1, %s14
      %p168 = scmp.lt.s32.totalorder %s14, 3
      %p169 = pnand %p167, %p168
      %p170 = pneg %p169
      // Predicated region
      $region29: #{tpu_custom_call.1} parent=5 // pred_check
        _
      $region30: #{tpu_custom_call.1} parent=5 // pred_check_branch
        %172 = sbr.rel (%p169) target = $region32
      $region31: #{tpu_custom_call.1} parent=5 // pred_region
        %s173 = ssub.s32 %s14, 1
        // Predicated region
        $region33: #{tpu_custom_call.1} parent=31 // pred_check
          %p174 = pneg %p35
        $region34: #{tpu_custom_call.1} parent=31 // pred_check_branch
          %176 = sbr.rel (%p174) target = $region36
        $region35: #{tpu_custom_call.1} parent=31 // pred_region
          %177 = dma.done [#allocation3], 16
        $region36: #{tpu_custom_call.1} parent=31 // pred_fallthru
          _
        // Predicated region
        $region37: #{tpu_custom_call.1} parent=31 // pred_check
          %p178 = pneg %p56
        $region38: #{tpu_custom_call.1} parent=31 // pred_check_branch
          %180 = sbr.rel (%p178) target = $region40
        $region39: #{tpu_custom_call.1} parent=31 // pred_region
          %181 = dma.done [#allocation6], 128
        $region40: #{tpu_custom_call.1} parent=31 // pred_fallthru
          _
        %s182 = sand.u32 %s19, 1
        %s183 = scalar_lea.sflag [#allocation3], %s182
        %s184 = sand.u32 %s69, 1
        %s185 = smul.addr %s184, 8
        %s186 = scalar_lea.vmem [#allocation7], %s185
        // Predicated region
        $region41: #{tpu_custom_call.1} parent=31 // pred_check
          %p187 = pneg %p82
        $region42: #{tpu_custom_call.1} parent=31 // pred_check_branch
          %189 = sbr.rel (%p187) target = $region44
        $region43: #{tpu_custom_call.1} parent=31 // pred_region
          %190 = dma.done %s183, 128
        $region44: #{tpu_custom_call.1} parent=31 // pred_fallthru
          _
        %p191 = pneg %p35
        %p192 = pneg %p32
        %p193 = pneg %p56
        %p194 = pneg %p53
        %s195 = sand.u32 %s19, 1
        %s196 = scalar_lea.sflag [#allocation3], %s195
        %s197 = sand.u32 %s69, 1
        %s198 = smul.addr %s197, 8
        %s199 = scalar_lea.vmem [#allocation7], %s198
        %p200 = pneg %p82
        %p201 = pneg %p79
        %p202 = pneg %p108
        %p203 = pneg %p105
        %s204 = sand.u32 %s95, 1
        %s205 = scalar_lea.sflag [#allocation4], %s204
        %s206 = sand.u32 %s95, 1
        %s207 = smul.addr %s206, 16
        %s208 = scalar_lea.vmem [#allocation8], %s207
        %v209 = vld [vmem:[#allocation2] sm:$0x1]
        %vm210 = vcmask 253952
        %211 = vst.msk [vmem:[%s208] sm:$0x1] %vm210, %v209
        %v212 = vld [vmem:[%s186] sm:$0xff]
        %v213 = vld [vmem:[#allocation5] sm:$0xff]
        %v214 = vadd.f32 %v212, %v213
        %vm215 = vcmask 261120
        %216 = vst.msk [vmem:[%s208 + $0x1] sm:$0xff] %vm215, %v214
        %s217 = sand.u32 %s95, 1
        %s218 = scalar_lea.sflag [#allocation4], %s217
        %s219 = sand.u32 %s95, 1
        %s220 = smul.addr %s219, 16
        %s221 = scalar_lea.vmem [#allocation8], %s220
        // Predicated region
        $region45: #{tpu_custom_call.1} parent=31 // pred_check
          %p222 = pneg %p105
        $region46: #{tpu_custom_call.1} parent=31 // pred_check_branch
          %224 = sbr.rel (%p222) target = $region48
        $region47: #{tpu_custom_call.1} parent=31 // pred_region
          %s226 = ssub.s32 256, 256
          %227 = vsyncadd %s218, %s226
          %s228 = smul.addr %s19, 2
          %s229 = smul.addr %s228, 128
          %s230 = scalar_lea.hbm %s3, %s229
          %s231 = sshll.u32 %s221, 4
          %s232 = int_to_ptr.vmem [resolvable:$true] %s231
          %237 = dma.vmem_to_hbm [thread:$0]  %s232, 256, %s230, %s218, 128, 128, 8
        $region48: #{tpu_custom_call.1} parent=31 // pred_fallthru
          _
      $region32: #{tpu_custom_call.1} parent=5 // pred_fallthru
        _
      %p238 = scmp.le.s32.totalorder 2, %s14
      // Predicated region
      $region49: #{tpu_custom_call.1} parent=5 // pred_check
        %p239 = pneg %p238
      $region50: #{tpu_custom_call.1} parent=5 // pred_check_branch
        %241 = sbr.rel (%p239) target = $region52
      $region51: #{tpu_custom_call.1} parent=5 // pred_region
        %s242 = ssub.s32 %s14, 2
        // Predicated region
        $region53: #{tpu_custom_call.1} parent=51 // pred_check
          %p243 = pneg %p111
        $region54: #{tpu_custom_call.1} parent=51 // pred_check_branch
          %245 = sbr.rel (%p243) target = $region56
        $region55: #{tpu_custom_call.1} parent=51 // pred_region
          %s246 = sand.u32 %s96, 1
          %s247 = scalar_lea.sflag [#allocation4], %s246
          %s248 = sand.u32 %s96, 1
          %s249 = smul.addr %s248, 16
          %s250 = scalar_lea.vmem [#allocation8], %s249
          %251 = dma.done %s247, 256
        $region56: #{tpu_custom_call.1} parent=51 // pred_fallthru
          _
      $region52: #{tpu_custom_call.1} parent=5 // pred_fallthru
        _
    $region6: #{tpu_custom_call.1} parent=1 // loop_footer
      %s18 = sadd.s32 1, %s14
    $region7: #{tpu_custom_call.1} parent=1 // loop_footer_branch
      %13 = sbr.rel target = $region3
    $region8: #{tpu_custom_call.1} parent=1 // loop_exit
      _
    %252 = vsyncpa [#allocation3], 1
    %s253 = scalar_lea.sflag [#allocation3], 1
    %254 = vsyncpa %s253, 1
    %255 = vsyncpa [#allocation6], 1
    %256 = vsyncpa [#allocation4], 1
    %s257 = scalar_lea.sflag [#allocation4], 1
    %258 = vsyncpa %s257, 1

</llo_original>
